<compile_context>
chip_gen: v5e
topology: v5e:2x2
jax: 0.10.0
libtpu: 0.0.40
codegen_flags: <defaults>
</compile_context>

<pallas_src>
import functools

import jax
import jax.numpy as jnp
from jax.experimental import pallas as pl
from jax.experimental.pallas import tpu as pltpu

LANES = 128
SUBLANES = 8
ACC_ROWS = 64          # (64, 128) f32 accumulator = 32 KiB, 8 independent chains
_SMALL_ELEMS = 512 * 1024   # below this a fused XLA reduction wins (review)


@functools.lru_cache(maxsize=1)
def _hw_config():
    """Generation-aware tiling / VMEM configuration (review: not one constant)."""
    kind = ""
    try:
        kind = jax.devices()[0].device_kind.lower()
    except Exception:
        pass
    is_v7 = ("v7" in kind) or ("7x" in kind)
    is_v6 = ("v6" in kind) or ("trillium" in kind)
    if is_v7:
        # ~3.2 TB/s HBM: 6 MiB/input blocks keep the ~0.35 us/step fixed cost
        # under ~10%.  2 inputs x 2 buffers x 6 MiB = 24 MiB; raise the scoped
        # VMEM limit explicitly (64 MiB physical on v7x).
        cfg = dict(block_bytes=6 << 20, vmem_limit=40 << 20,
                   two_core_split=True, lead_semantics=pltpu.CORE_PARALLEL)
    elif is_v6:
        # 2 MiB/input already ~85-86% of roofline on v6e; default scoped VMEM
        # (32 MiB) is plenty for 2 x 2 x 2 MiB.
        cfg = dict(block_bytes=2 << 20, vmem_limit=None,
                   two_core_split=False, lead_semantics=pltpu.ARBITRARY)
    else:
        # v5e / unknown: keep blocks small, 16 MiB scoped-VMEM default.
        cfg = dict(block_bytes=2 << 20, vmem_limit=None,
                   two_core_split=False, lead_semantics=pltpu.ARBITRARY)
    if cfg["vmem_limit"] is not None:
        try:
            cap = pltpu.get_tpu_info().vmem_capacity_bytes
            cfg["vmem_limit"] = min(cfg["vmem_limit"], int(cap * 0.625))
        except Exception:
            pass
    return cfg


def _make_sumsq_kernel(block_rows, acc_rows, needs_mask, valid_rows_last):
    """Builds a kernel accumulating sum((t - p)^2) over the inner grid axis."""
    groups = block_rows // acc_rows

    def kernel(p_ref, t_ref, out_ref, acc_ref):
        j = pl.program_id(1)

        @pl.when(j == 0)
        def _init():
            acc_ref[...] = jnp.zeros_like(acc_ref)

        if needs_mask:
            # Only the globally-last block is partial; its invalid rows hold
            # stale VMEM data and must not contribute.  valid_rows_last is a
            # trace-time constant, so no scalar prefetch is needed.
            is_last = jnp.logical_and(
                pl.program_id(0) == pl.num_programs(0) - 1,
                j == pl.num_programs(1) - 1)
            valid_rows = jnp.where(is_last, valid_rows_last, block_rows)
            row_iota = jax.lax.broadcasted_iota(jnp.int32, (acc_rows, LANES), 0)

        def body(g, acc):
            off = pl.multiple_of(g * acc_rows, acc_rows)
            # Native-dtype loads (bf16 stays bf16 over the DMA); f32 math on VPU.
            pv = p_ref[pl.ds(off, acc_rows), :].astype(jnp.float32)
            tv = t_ref[pl.ds(off, acc_rows), :].astype(jnp.float32)
            d = tv - pv
            sq = d * d
            if needs_mask:
                keep = (row_iota + off) < valid_rows
                sq = jnp.where(keep, sq, 0.0)
            return acc + sq           # 8 independent vreg accumulation chains

        part = jax.lax.fori_loop(
            0, groups, body, jnp.zeros((acc_rows, LANES), jnp.float32))
        acc_ref[...] = acc_ref[...] + part   # fold into scratch once per step

        # Cross-sublane / cross-lane reduce only at the very end.  Correct
        # because the reduction axis (j) is the innermost grid axis, so the
        # output block index does not change before the last j (do not reorder
        # the grid axes without revisiting this).
        @pl.when(j == pl.num_programs(1) - 1)
        def _finalize():
            col = jnp.sum(acc_ref[...], axis=0, keepdims=True)   # (1, LANES)
            out_ref[...] = jnp.sum(col, axis=1, keepdims=True)    # (1, 1)

    return kernel


def mse_loss_pallas(pred, target):
    """mean((target - pred)^2) over all elements via a streaming Pallas kernel."""
    assert pred.shape == target.shape, "pred/target shape mismatch"
    total = int(pred.size)
    assert total > 0

    # Ragged (non lane-aligned) or degenerate totals: a single fused XLA
    # reduction reads each operand exactly once and writes a scalar -- no pad
    # copy, already HBM-optimal for a memory-bound MSE (review option (b)).
    if total % LANES != 0 or total < SUBLANES * LANES:
        d = target.astype(jnp.float32) - pred.astype(jnp.float32)
        return jnp.mean(d * d)

    cfg = _hw_config()
    itemsize = jnp.dtype(pred.dtype).itemsize
    rows = total // LANES                       # exact, no padding

    ideal_rows = max(SUBLANES, cfg["block_bytes"] // (LANES * itemsize))
    ideal_rows -= ideal_rows % ACC_ROWS
    block_rows = min(ideal_rows, rows - rows % SUBLANES)   # multiple of 8, <= rows
    acc_rows = ACC_ROWS if block_rows % ACC_ROWS == 0 else SUBLANES

    p2 = pred.reshape(rows, LANES)              # lane-dense slab, no jnp.pad
    t2 = target.reshape(rows, LANES)

    num_blocks = -(-rows // block_rows)         # cdiv: last block may be partial
    valid_rows_last = rows - (num_blocks - 1) * block_rows
    needs_mask = (rows % block_rows) != 0

    # 2-way split only where there are really two TensorCores (v7x); marked
    # CORE_PARALLEL so the halves genuinely land on different cores.
    nsplit = 2 if (cfg["two_core_split"] and num_blocks >= 2
                   and num_blocks % 2 == 0) else 1
    inner = num_blocks // nsplit
    lead_sem = cfg["lead_semantics"] if nsplit == 2 else pltpu.ARBITRARY

    kernel = _make_sumsq_kernel(block_rows, acc_rows, needs_mask, valid_rows_last)

    partials = pl.pallas_call(
        kernel,
        out_shape=jax.ShapeDtypeStruct((nsplit, 1), jnp.float32),
        grid_spec=pltpu.PrefetchScalarGridSpec(
            num_scalar_prefetch=0,
            grid=(nsplit, inner),
            in_specs=[
                pl.BlockSpec((block_rows, LANES), lambda s, j: (s * inner + j, 0)),
                pl.BlockSpec((block_rows, LANES), lambda s, j: (s * inner + j, 0)),
            ],
            out_specs=pl.BlockSpec((1, 1), lambda s, j: (s, 0)),
            scratch_shapes=[pltpu.VMEM((acc_rows, LANES), jnp.float32)],
        ),
        compiler_params=pltpu.CompilerParams(
            dimension_semantics=(lead_sem, pltpu.ARBITRARY),
            vmem_limit_bytes=cfg["vmem_limit"],
        ),
    )(p2, t2)

    return jnp.sum(partials) * (1.0 / float(total))


def mse_loss(pred, target):
    """Dispatcher: fused XLA reduction for small tensors, Pallas otherwise."""
    if pred.size < _SMALL_ELEMS:
        d = target.astype(jnp.float32) - pred.astype(jnp.float32)
        return jnp.mean(d * d)
    return mse_loss_pallas(pred, target)


class ContentLoss:
    """JAX/Pallas mirror of the PyTorch ContentLoss module."""

    def __init__(self, target, loss_fn=mse_loss):
        self.loss_fn = loss_fn
        self.target = jax.lax.stop_gradient(target)   # .detach()
        # mse(target, target) == 0 identically; skip the wasted full HBM pass
        # the PyTorch module pays just to initialize self.loss.
        self.loss = jnp.zeros((), jnp.float32)

    def __call__(self, x):
        # forward: compute loss against the stored target, return input unchanged.
        # NOTE: stashing self.loss is a Python side effect; under jax.jit call
        # self.loss_fn(x, self.target) and return the loss explicitly.
        self.loss = self.loss_fn(x, self.target)
        return x


if __name__ == "__main__":
    key = jax.random.PRNGKey(0)
    k0, k1, k2, k3, k4, k5 = jax.random.split(key, 6)

    # --- 1) Small NCHW feature map through the ContentLoss module (Pallas path). ---
    target = jax.random.normal(k0, (2, 4, 16, 16), dtype=jnp.float32)
    x = jax.random.normal(k1, (2, 4, 16, 16), dtype=jnp.float32)

    module = ContentLoss(target, loss_fn=mse_loss_pallas)
    assert float(module.loss) == 0.0                              # skipped self-loss
    out = jax.block_until_ready(module(x))
    loss = jax.block_until_ready(module.loss)

    ref_loss = jnp.mean((target - x) ** 2)
    assert out.shape == x.shape
    assert jnp.allclose(out, x)                                   # passthrough
    assert jnp.allclose(loss, ref_loss, rtol=1e-5, atol=1e-6)
    assert jnp.allclose(mse_loss(x, target), ref_loss, rtol=1e-5, atol=1e-6)

    # --- 2) Ragged total (not lane-aligned): fused-XLA fallback, no pad copy. ---
    t_odd = jax.random.normal(k2, (3, 5, 7, 11), dtype=jnp.float32)
    x_odd = jax.random.normal(k3, (3, 5, 7, 11), dtype=jnp.float32)
    l_odd = jax.block_until_ready(mse_loss_pallas(x_odd, t_odd))
    assert jnp.allclose(l_odd, jnp.mean((t_odd - x_odd) ** 2), rtol=1e-5, atol=1e-6)

    # --- 3) Lane-aligned but non-divisible rows: partial-last-block masking path. ---
    t_msk = jax.random.normal(k2, (1, 19, 8, 16), dtype=jnp.float32)   # 19 rows of 128
    x_msk = jax.random.normal(k3, (1, 19, 8, 16), dtype=jnp.float32)
    l_msk = jax.block_until_ready(mse_loss_pallas(x_msk, t_msk))
    assert jnp.allclose(l_msk, jnp.mean((t_msk - x_msk) ** 2), rtol=1e-5, atol=1e-6)

    # --- 4) Larger map: multi-step accumulation across the reduction grid axis. ---
    t_big = jax.random.normal(k4, (2, 64, 64, 128), dtype=jnp.float32)
    x_big = jax.random.normal(k5, (2, 64, 64, 128), dtype=jnp.float32)
    l_big = jax.block_until_ready(mse_loss_pallas(x_big, t_big))
    assert jnp.allclose(l_big, jnp.mean((t_big - x_big) ** 2), rtol=3e-5, atol=1e-6)

    # --- 5) bf16 inputs: native-dtype DMA, f32 math in-kernel. ---
    t_bf = target.astype(jnp.bfloat16)
    x_bf = x.astype(jnp.bfloat16)
    l_bf = jax.block_until_ready(mse_loss_pallas(x_bf, t_bf))
    ref_bf = jnp.mean((t_bf.astype(jnp.float32) - x_bf.astype(jnp.float32)) ** 2)
    assert jnp.allclose(l_bf, ref_bf, rtol=1e-5, atol=1e-6)

    print("KERNEL_OK")
</pallas_src>

<mosaic_0001>
module attributes {stable_mosaic.version = 11 : i64} {
  func.func @kernel(%arg0: i32, %arg1: i32, %arg2: memref<16x128xf32, #tpu.memory_space<vmem>>, %arg3: memref<16x128xf32, #tpu.memory_space<vmem>>, %arg4: memref<1x1xf32, #tpu.memory_space<vmem>>, %arg5: memref<8x128xf32, #tpu.memory_space<vmem>>) attributes {dimension_semantics = [#tpu.dimension_semantics<arbitrary>, #tpu.dimension_semantics<arbitrary>], iteration_bounds = array<i64: 1, 1>, scalar_prefetch = 0 : i64, scratch_operands = 1 : i64, tpu.core_type = #tpu.core_type<tc>, window_params = [{transform_indices = @transform_0, window_bounds = array<i64: 16, 128>}, {transform_indices = @transform_1, window_bounds = array<i64: 16, 128>}, {transform_indices = @transform_2, window_bounds = array<i64: 1, 1>}]} {
    %c0_i32 = arith.constant 0 : i32
    %0 = arith.cmpi eq, %arg1, %c0_i32 : i32
    %1 = arith.extui %0 : i1 to i32
    %c0_i32_0 = arith.constant 0 : i32
    %2 = arith.cmpi ne, %1, %c0_i32_0 : i32
    scf.if %2 {
      %cst_8 = arith.constant 0.000000e+00 : f32
      %12 = vector.broadcast %cst_8 : f32 to vector<8x128xf32>
      %c0_9 = arith.constant 0 : index
      %c0_10 = arith.constant 0 : index
      %13 = vector.load %arg5[%c0_9, %c0_10] : memref<8x128xf32, #tpu.memory_space<vmem>>, vector<8x128xf32>
      tpu.vector_store %arg5[%c0_9, %c0_10], %12 {strides = array<i32>} : memref<8x128xf32, #tpu.memory_space<vmem>>, vector<8x128xf32>,
    } else {
    }
    %cst = arith.constant 0.000000e+00 : f32
    %3 = vector.broadcast %cst : f32 to vector<8x128xf32>
    %c0_i32_1 = arith.constant 0 : i32
    %c2_i32 = arith.constant 2 : i32
    %4 = arith.addi %c0_i32_1, %c2_i32 : i32
    %c1_i32 = arith.constant 1 : i32
    %5 = scf.for %arg6 = %c0_i32_1 to %4 step %c1_i32 iter_args(%arg7 = %3) -> (vector<8x128xf32>)  : i32 {
      %c8_i32 = arith.constant 8 : i32
      %12 = arith.muli %arg6, %c8_i32 : i32
      %13 = tpu.assume_multiple %12, 8 : i32
      %14 = arith.index_cast %13 : i32 to index
      %c0_8 = arith.constant 0 : index
      %15 = vector.load %arg2[%14, %c0_8] : memref<16x128xf32, #tpu.memory_space<vmem>>, vector<8x128xf32>
      %16 = arith.index_cast %13 : i32 to index
      %c0_9 = arith.constant 0 : index
      %17 = vector.load %arg3[%16, %c0_9] : memref<16x128xf32, #tpu.memory_space<vmem>>, vector<8x128xf32>
      %18 = arith.subf %17, %15 : vector<8x128xf32>
      %19 = arith.mulf %18, %18 : vector<8x128xf32>
      %20 = arith.addf %arg7, %19 : vector<8x128xf32>
      scf.yield %20 : vector<8x128xf32>
    }
    %c2_i32_2 = arith.constant 2 : i32
    %c0 = arith.constant 0 : index
    %c0_3 = arith.constant 0 : index
    %6 = vector.load %arg5[%c0, %c0_3] : memref<8x128xf32, #tpu.memory_space<vmem>>, vector<8x128xf32>
    %7 = arith.addf %6, %5 : vector<8x128xf32>
    %c0_4 = arith.constant 0 : index
    %c0_5 = arith.constant 0 : index
    %8 = vector.load %arg5[%c0_4, %c0_5] : memref<8x128xf32, #tpu.memory_space<vmem>>, vector<8x128xf32>
    tpu.vector_store %arg5[%c0_4, %c0_5], %7 {strides = array<i32>} : memref<8x128xf32, #tpu.memory_space<vmem>>, vector<8x128xf32>,
    %c0_i32_6 = arith.constant 0 : i32
    %9 = arith.cmpi eq, %arg1, %c0_i32_6 : i32
    %10 = arith.extui %9 : i1 to i32
    %c0_i32_7 = arith.constant 0 : i32
    %11 = arith.cmpi ne, %10, %c0_i32_7 : i32
    scf.if %11 {
      %c0_8 = arith.constant 0 : index
      %c0_9 = arith.constant 0 : index
      %12 = vector.load %arg5[%c0_8, %c0_9] : memref<8x128xf32, #tpu.memory_space<vmem>>, vector<8x128xf32>
      %cst_10 = arith.constant dense<0.000000e+00> : vector<128xf32>
      %13 = vector.multi_reduction <add>, %12, %cst_10 [0] : vector<8x128xf32> to vector<128xf32>
      %14 = vector.shape_cast %13 : vector<128xf32> to vector<1x128xf32>
      %cst_11 = arith.constant dense<0.000000e+00> : vector<1xf32>
      %15 = vector.multi_reduction <add>, %14, %cst_11 [1] : vector<1x128xf32> to vector<1xf32>
      %16 = vector.shape_cast %15 : vector<1xf32> to vector<1x1xf32>
      %c0_12 = arith.constant 0 : index
      %c0_13 = arith.constant 0 : index
      %17 = vector.load %arg4[%c0_12, %c0_13] : memref<1x1xf32, #tpu.memory_space<vmem>>, vector<1x1xf32>
      tpu.vector_store %arg4[%c0_12, %c0_13], %16 {strides = array<i32>} : memref<1x1xf32, #tpu.memory_space<vmem>>, vector<1x1xf32>,
    } else {
    }
    return
  }
  func.func @transform_0(%arg0: i32, %arg1: i32) -> (i32, i32) {
    %c1_i32 = arith.constant 1 : i32
    %0 = arith.muli %arg0, %c1_i32 : i32
    %1 = arith.addi %0, %arg1 : i32
    %c0_i32 = arith.constant 0 : i32
    %c0_i32_0 = arith.constant 0 : i32
    return %1, %c0_i32 : i32, i32
  }
  func.func @transform_1(%arg0: i32, %arg1: i32) -> (i32, i32) {
    %c1_i32 = arith.constant 1 : i32
    %0 = arith.muli %arg0, %c1_i32 : i32
    %1 = arith.addi %0, %arg1 : i32
    %c0_i32 = arith.constant 0 : i32
    %c0_i32_0 = arith.constant 0 : i32
    return %1, %c0_i32 : i32, i32
  }
  func.func @transform_2(%arg0: i32, %arg1: i32) -> (i32, i32) {
    %c0_i32 = arith.constant 0 : i32
    %c0_i32_0 = arith.constant 0 : i32
    return %arg0, %c0_i32 : i32, i32
  }
}

</mosaic_0001>

<llo_original>
// kernel: tpu_custom_call.1
$region0: #{tpu_custom_call.1}
  #allocation0 [shape = 'u32[]', space=smem, size = 0x4, offset = 0x4, fixed_abs, tag = 'smem constant byte address 0x4 - core index']
  #allocation1 [shape = 'u32[72,128]{1,0:T(1,128)}', space=vmem, size = 0x9000, scoped, tag = 'internal scratch']
  #allocation2 [shape = 'f32[8,128]{1,0:T(8,128)}', space=vmem, size = 0x1000, scoped, tag = 'scratch operand']
  %s0 = inlined_call_operand.hbm [shape: f32[16,128], index: 0, kind: input, shape index: {}]
  %s1 = inlined_call_operand.hbm [shape: f32[16,128], index: 1, kind: input, shape index: {}]
  %s2 = inlined_call_operand.hbm [shape: f32[1,1], index: 2, kind: output, shape index: {}]
  %s3 = sld [smem:[#allocation0]]
  $region41: #{tpu_custom_call.1} parent=0
    _
  %s5 = ssub.s32 1, %s3
  %s6 = scalar_select 0, %s5, %s3
  $region1: #{tpu_custom_call.1} parent=0
    #allocation3 [shape = 'u8[8192]{0}', space=vmem, size = 0x2000, scoped, tag = 'input window, operand 0, single buffered']
    #allocation4 [shape = 's32[1]{0}', space=sflag, size = 0x4, scoped, tag = 'scoped memory for tpu_custom_call.1']
    #allocation5 [shape = 's32[1]{0}', space=sflag, size = 0x4, scoped, tag = 'scoped memory for tpu_custom_call.1']
    #allocation6 [shape = 'u8[8192]{0}', space=vmem, size = 0x2000, scoped, tag = 'input window, operand 1, single buffered']
    #allocation7 [shape = 's32[1]{0}', space=sflag, size = 0x4, scoped, tag = 'scoped memory for tpu_custom_call.1']
    #allocation8 [shape = 'u8[512]{0}', space=vmem, size = 0x400, scoped, tag = 'output window, operand 0, single buffered']
    %7 = vsyncpa [#allocation4], 0
    %8 = vsyncpa [#allocation7], 0
    %9 = vsyncpa [#allocation5], 0
    // Predicated region
    $region2: #{tpu_custom_call.1} parent=1 // pred_check
      _
    $region3: #{tpu_custom_call.1} parent=1 // pred_check_branch
      %11 = sbr.rel (0) target = $region5
    $region4: #{tpu_custom_call.1} parent=1 // pred_region
      %s12 = sadd.s32 0, 0
      %s13 = smul.u32 2, %s12
      %15 = vsyncadd [#allocation4], 0
      %s16 = smul.addr %s13, 8
      %s17 = scalar_lea.hbm %s0, %s16
      %s18 = sshll.u32 %s17, 4
      %s19 = int_to_ptr.hbm [resolvable:$true] %s18
      %s20 = sshll.u32 [#allocation3], 4
      %s21 = int_to_ptr.vmem [resolvable:$true] %s20
      %26 = dma.hbm_to_vmem [thread:$0]  %s19, 256, %s21, [#allocation4], 128, 128, 8
    $region5: #{tpu_custom_call.1} parent=1 // pred_fallthru
      _
    // Predicated region
    $region6: #{tpu_custom_call.1} parent=1 // pred_check
      _
    $region7: #{tpu_custom_call.1} parent=1 // pred_check_branch
      %28 = sbr.rel (0) target = $region9
    $region8: #{tpu_custom_call.1} parent=1 // pred_region
      %s29 = sadd.s32 0, 0
      %s30 = smul.u32 2, %s29
      %32 = vsyncadd [#allocation7], 0
      %s33 = smul.addr %s30, 8
      %s34 = scalar_lea.hbm %s1, %s33
      %s35 = sshll.u32 %s34, 4
      %s36 = int_to_ptr.hbm [resolvable:$true] %s35
      %s37 = sshll.u32 [#allocation6], 4
      %s38 = int_to_ptr.vmem [resolvable:$true] %s37
      %43 = dma.hbm_to_vmem [thread:$0]  %s36, 256, %s38, [#allocation7], 128, 128, 8
    $region9: #{tpu_custom_call.1} parent=1 // pred_fallthru
      _
    // Predicated region
    $region10: #{tpu_custom_call.1} parent=1 // pred_check
      _
    $region11: #{tpu_custom_call.1} parent=1 // pred_check_branch
      %45 = sbr.rel (0) target = $region13
    $region12: #{tpu_custom_call.1} parent=1 // pred_region
      %47 = dma.done [#allocation4], 256
    $region13: #{tpu_custom_call.1} parent=1 // pred_fallthru
      _
    // Predicated region
    $region14: #{tpu_custom_call.1} parent=1 // pred_check
      _
    $region15: #{tpu_custom_call.1} parent=1 // pred_check_branch
      %49 = sbr.rel (0) target = $region17
    $region16: #{tpu_custom_call.1} parent=1 // pred_region
      %51 = dma.done [#allocation7], 256
    $region17: #{tpu_custom_call.1} parent=1 // pred_fallthru
      _
    %s52 = sadd.s32 0, 0
    %s53 = smul.u32 2, %s52
    %s54 = sadd.s32 0, 0
    %s55 = smul.u32 2, %s54
    %p56 = scmp.eq.s32.totalorder 0, 0
    // Predicated region
    $region18: #{tpu_custom_call.1} parent=1 // pred_check
      %p57 = pneg %p56
    $region19: #{tpu_custom_call.1} parent=1 // pred_check_branch
      %59 = sbr.rel (%p57) target = $region21
    $region20: #{tpu_custom_call.1} parent=1 // pred_region
      %60 = vst [vmem:[#allocation2] sm:$0xff] 0.0
    $region21: #{tpu_custom_call.1} parent=1 // pred_fallthru
      _
    loop: start=0, step=1, limit=2
    $region22: #{tpu_custom_call.1} parent=1 // loop_pre_header
      _
    $region23: #{tpu_custom_call.1} parent=1 // loop_header
      %s62 = sphi 0, %s66
      %p63 = scmp.ge.s32.totalorder %s62, 2
      %v67 = vphi 0.0, %v75
    $region24: #{tpu_custom_call.1} parent=1 // loop_header_branch
      %65 = sbr.rel (%p63) target = $region28
    $region25: #{tpu_custom_call.1} parent=1 // loop_body
      %s68 = smul.u32 %s62, 8
      %s69 = scalar_lea.vmem [#allocation3], %s68
      %v70 = vld [vmem:[%s69] sm:$0xff]
      %s71 = scalar_lea.vmem [#allocation6], %s68
      %v72 = vld [vmem:[%s71] sm:$0xff]
      %v73 = vsub.f32 %v72, %v70
      %v74 = vmul.f32 %v73, %v73
      %v75 = vadd.f32 %v67, %v74
    $region26: #{tpu_custom_call.1} parent=1 // loop_footer
      %s66 = sadd.s32 1, %s62
    $region27: #{tpu_custom_call.1} parent=1 // loop_footer_branch
      %61 = sbr.rel target = $region23
    $region28: #{tpu_custom_call.1} parent=1 // loop_exit
      _
    %v76 = vld [vmem:[#allocation2] sm:$0xff]
    %v77 = vadd.f32 %v76, %v67
    %78 = vst [vmem:[#allocation2] sm:$0xff] %v77
    // Predicated region
    $region29: #{tpu_custom_call.1} parent=1 // pred_check
      %p79 = pneg %p56
    $region30: #{tpu_custom_call.1} parent=1 // pred_check_branch
      %81 = sbr.rel (%p79) target = $region32
    $region31: #{tpu_custom_call.1} parent=1 // pred_region
      %v82 = vld [vmem:[#allocation2] sm:$0xff]
      %v83 = vrot.slane %v82, 4
      %v84 = vadd.f32 %v82, %v83
      %v85 = vrot.slane %v84, 2
      %v86 = vadd.f32 %v84, %v85
      %v87 = vrot.slane %v86, 1
      %v88 = vadd.f32 %v86, %v87
      %89 = vadd.xlane.f32.xlu0 %v88
      %v90 = vpop.xlane.xlu0 %89
      %vm91 = vcmask 0
      %92 = vst.msk [vmem:[#allocation8] sm:$0x1] %vm91, %v90
    $region32: #{tpu_custom_call.1} parent=1 // pred_fallthru
      _
    // Predicated region
    $region33: #{tpu_custom_call.1} parent=1 // pred_check
      _
    $region34: #{tpu_custom_call.1} parent=1 // pred_check_branch
      %94 = sbr.rel (0) target = $region36
    $region35: #{tpu_custom_call.1} parent=1 // pred_region
      %96 = vsyncadd [#allocation5], 0
      %s98 = sshll.u32 [#allocation8], 4
      %s99 = int_to_ptr.vmem [resolvable:$true] %s98
      %s100 = sshll.u32 %s2, 4
      %s101 = int_to_ptr.hbm [resolvable:$true] %s100
      %103 = dma.vmem_to_hbm [thread:$0]  %s99, 16, %s101, [#allocation5]
    $region36: #{tpu_custom_call.1} parent=1 // pred_fallthru
      _
    // Predicated region
    $region37: #{tpu_custom_call.1} parent=1 // pred_check
      _
    $region38: #{tpu_custom_call.1} parent=1 // pred_check_branch
      %105 = sbr.rel (0) target = $region40
    $region39: #{tpu_custom_call.1} parent=1 // pred_region
      %107 = dma.done [#allocation5], 16
    $region40: #{tpu_custom_call.1} parent=1 // pred_fallthru
      _
    %108 = vsyncpa [#allocation4], 1
    %109 = vsyncpa [#allocation7], 1
    %110 = vsyncpa [#allocation5], 1

</llo_original>
